<compile_context>
chip_gen: v6e
topology: v6e:2x2x1
jax: 0.10.0
libtpu: 0.0.40
codegen_flags: <defaults>
</compile_context>

<pallas_src>
import jax
import jax.numpy as jnp
from jax.experimental import pallas as pl
from jax.experimental.pallas import tpu as pltpu

_LANE = 128          # TPU lane width
_TM = 128            # batch tile (MXU M dimension)
_H1, _H2, _H3 = 128, 256, 128


def _round_up(n, m):
    return ((n + m - 1) // m) * m


def _mlp_kernel(x_ref,
                w1_ref, b1_ref,
                w2_ref, b2_ref,
                w3_ref, b3_ref,
                w4_ref, b4_ref,
                o_ref):
    # bf16 operands -> f32 accumulation; elementwise (bias add, ReLU) in f32.
    h = jnp.dot(x_ref[...], w1_ref[...], preferred_element_type=jnp.float32) + b1_ref[...]
    h = jnp.maximum(h, 0.0).astype(jnp.bfloat16)

    h = jnp.dot(h, w2_ref[...], preferred_element_type=jnp.float32) + b2_ref[...]
    h = jnp.maximum(h, 0.0).astype(jnp.bfloat16)

    h = jnp.dot(h, w3_ref[...], preferred_element_type=jnp.float32) + b3_ref[...]
    h = jnp.maximum(h, 0.0).astype(jnp.bfloat16)

    out = jnp.dot(h, w4_ref[...], preferred_element_type=jnp.float32) + b4_ref[...]
    o_ref[...] = out.astype(o_ref.dtype)


@jax.jit
def net_forward(x, params):
    """params = (w1, b1, w2, b2, w3, b3, w4, b4); w_i: (fan_in, fan_out) f32, b_i: (1, fan_out) f32."""
    w1, b1, w2, b2, w3, b3, w4, b4 = params
    batch, in_features = x.shape
    out_features = w4.shape[1]

    in_pad = _round_up(in_features, _LANE)
    out_pad = _round_up(out_features, _LANE)
    b_pad = _round_up(batch, _TM)

    bf16 = jnp.bfloat16

    # Zero-pad to lane-dense shapes and cast matmul operands to bf16.
    xp = jnp.zeros((b_pad, in_pad), bf16).at[:batch, :in_features].set(x.astype(bf16))
    w1p = jnp.zeros((in_pad, _H1), bf16).at[:in_features, :].set(w1.astype(bf16))
    w2p = w2.astype(bf16)
    w3p = w3.astype(bf16)
    w4p = jnp.zeros((_H3, out_pad), bf16).at[:, :out_features].set(w4.astype(bf16))
    b4p = jnp.zeros((1, out_pad), jnp.float32).at[:, :out_features].set(b4)

    grid = (b_pad // _TM,)

    # Activation / output blocks walk the batch grid; weights & biases stay resident.
    act_spec = lambda feat: pl.BlockSpec((_TM, feat), lambda i: (i, 0))
    res_spec = lambda shape: pl.BlockSpec(shape, lambda i: (0, 0))

    flops = 2 * b_pad * (in_pad * _H1 + _H1 * _H2 + _H2 * _H3 + _H3 * out_pad)
    bytes_accessed = (
        xp.size * 2
        + (w1p.size + w2p.size + w3p.size + w4p.size) * 2
        + (b1.size + b2.size + b3.size + b4p.size) * 4
        + b_pad * out_pad * 4
    )

    out_padded = pl.pallas_call(
        _mlp_kernel,
        out_shape=jax.ShapeDtypeStruct((b_pad, out_pad), jnp.float32),
        grid=grid,
        in_specs=[
            act_spec(in_pad),
            res_spec(w1p.shape), res_spec(b1.shape),
            res_spec(w2p.shape), res_spec(b2.shape),
            res_spec(w3p.shape), res_spec(b3.shape),
            res_spec(w4p.shape), res_spec(b4p.shape),
        ],
        out_specs=act_spec(out_pad),
        compiler_params=pltpu.CompilerParams(
            dimension_semantics=("parallel",),   # shard batch tiles across TCs on v7x
            vmem_limit_bytes=8 << 20,            # tight budget; fits v7x's 64 MiB easily
        ),
        cost_estimate=pl.CostEstimate(
            flops=flops, transcendentals=0, bytes_accessed=bytes_accessed),
    )(xp, w1p, b1, w2p, b2, w3p, b3, w4p, b4p)

    return out_padded[:batch, :out_features]


def init_params(key, in_features, out_features):
    """Deterministic init mimicking nn.Linear's U(-1/sqrt(fan_in), 1/sqrt(fan_in))."""
    dims = [in_features, _H1, _H2, _H3, out_features]
    params = []
    for i in range(4):
        fan_in, fan_out = dims[i], dims[i + 1]
        key, kw, kb = jax.random.split(key, 3)
        bound = 1.0 / jnp.sqrt(jnp.float32(fan_in))
        w = jax.random.uniform(kw, (fan_in, fan_out), jnp.float32, -bound, bound)
        b = jax.random.uniform(kb, (1, fan_out), jnp.float32, -bound, bound)
        params.extend([w, b])
    return tuple(params)


def reference_forward_bf16(x, params):
    """Same bf16-operand / f32-accumulate recipe as the kernel, in plain jnp."""
    w1, b1, w2, b2, w3, b3, w4, b4 = params
    bf16, f32 = jnp.bfloat16, jnp.float32
    h = jnp.maximum(jnp.dot(x.astype(bf16), w1.astype(bf16), preferred_element_type=f32) + b1, 0.0)
    h = jnp.maximum(jnp.dot(h.astype(bf16), w2.astype(bf16), preferred_element_type=f32) + b2, 0.0)
    h = jnp.maximum(jnp.dot(h.astype(bf16), w3.astype(bf16), preferred_element_type=f32) + b3, 0.0)
    return jnp.dot(h.astype(bf16), w4.astype(bf16), preferred_element_type=f32) + b4


if __name__ == "__main__":
    in_features = 32
    out_features = 10
    batch = 8

    key = jax.random.PRNGKey(0)
    key, kx = jax.random.split(key)
    x = jax.random.normal(kx, (batch, in_features), jnp.float32)
    params = init_params(key, in_features, out_features)

    out = net_forward(x, params)
    out = jax.block_until_ready(out)

    ref = reference_forward_bf16(x, params)
    assert out.shape == (batch, out_features)
    # bf16 operands in both paths -> tight tolerance vs. the matched reference.
    assert jnp.allclose(out, ref, atol=2e-2, rtol=2e-2), "mismatch vs JAX reference"

    print("KERNEL_OK")
</pallas_src>

<mosaic_0001>
module attributes {stable_mosaic.version = 11 : i64} {
  func.func @_mlp_kernel(%arg0: i32, %arg1: memref<128x128xbf16, #tpu.memory_space<vmem>>, %arg2: memref<128x128xbf16, #tpu.memory_space<vmem>>, %arg3: memref<1x128xf32, #tpu.memory_space<vmem>>, %arg4: memref<128x256xbf16, #tpu.memory_space<vmem>>, %arg5: memref<1x256xf32, #tpu.memory_space<vmem>>, %arg6: memref<256x128xbf16, #tpu.memory_space<vmem>>, %arg7: memref<1x128xf32, #tpu.memory_space<vmem>>, %arg8: memref<128x128xbf16, #tpu.memory_space<vmem>>, %arg9: memref<1x128xf32, #tpu.memory_space<vmem>>, %arg10: memref<128x128xf32, #tpu.memory_space<vmem>>) attributes {dimension_semantics = [#tpu.dimension_semantics<parallel>], iteration_bounds = array<i64: 1>, scalar_prefetch = 0 : i64, scratch_operands = 0 : i64, tpu.core_type = #tpu.core_type<tc>, window_params = [{transform_indices = @transform_0, window_bounds = array<i64: 128, 128>}, {pipeline_mode = #tpu.pipeline_mode<synchronous>, transform_indices = @transform_1, window_bounds = array<i64: 128, 128>}, {pipeline_mode = #tpu.pipeline_mode<synchronous>, transform_indices = @transform_2, window_bounds = array<i64: 1, 128>}, {pipeline_mode = #tpu.pipeline_mode<synchronous>, transform_indices = @transform_3, window_bounds = array<i64: 128, 256>}, {pipeline_mode = #tpu.pipeline_mode<synchronous>, transform_indices = @transform_4, window_bounds = array<i64: 1, 256>}, {pipeline_mode = #tpu.pipeline_mode<synchronous>, transform_indices = @transform_5, window_bounds = array<i64: 256, 128>}, {pipeline_mode = #tpu.pipeline_mode<synchronous>, transform_indices = @transform_6, window_bounds = array<i64: 1, 128>}, {pipeline_mode = #tpu.pipeline_mode<synchronous>, transform_indices = @transform_7, window_bounds = array<i64: 128, 128>}, {pipeline_mode = #tpu.pipeline_mode<synchronous>, transform_indices = @transform_8, window_bounds = array<i64: 1, 128>}, {transform_indices = @transform_9, window_bounds = array<i64: 128, 128>}]} {
    %c0 = arith.constant 0 : index
    %c0_0 = arith.constant 0 : index
    %0 = vector.load %arg1[%c0, %c0_0] : memref<128x128xbf16, #tpu.memory_space<vmem>>, vector<128x128xbf16>
    %c0_1 = arith.constant 0 : index
    %c0_2 = arith.constant 0 : index
    %1 = vector.load %arg2[%c0_1, %c0_2] : memref<128x128xbf16, #tpu.memory_space<vmem>>, vector<128x128xbf16>
    %cst = arith.constant dense<0.000000e+00> : vector<128x128xf32>
    %2 = tpu.matmul %0, %1, %cst {dimension_numbers = #tpu.dot_dimension_numbers<[1], [0], [0], [1], [0, 0, 1, 1], [], []>} : vector<128x128xbf16>, vector<128x128xbf16>, vector<128x128xf32> -> vector<128x128xf32>
    %c0_3 = arith.constant 0 : index
    %c0_4 = arith.constant 0 : index
    %3 = vector.load %arg3[%c0_3, %c0_4] : memref<1x128xf32, #tpu.memory_space<vmem>>, vector<1x128xf32>
    %4 = vector.broadcast %3 : vector<1x128xf32> to vector<128x128xf32>
    %5 = arith.addf %2, %4 : vector<128x128xf32>
    %cst_5 = arith.constant 0.000000e+00 : f32
    %6 = vector.broadcast %cst_5 : f32 to vector<128x128xf32>
    %7 = arith.maximumf %5, %6 : vector<128x128xf32>
    %8 = arith.truncf %7 : vector<128x128xf32> to vector<128x128xbf16>
    %c0_6 = arith.constant 0 : index
    %c0_7 = arith.constant 0 : index
    %9 = vector.load %arg4[%c0_6, %c0_7] : memref<128x256xbf16, #tpu.memory_space<vmem>>, vector<128x256xbf16>
    %cst_8 = arith.constant dense<0.000000e+00> : vector<128x256xf32>
    %10 = tpu.matmul %8, %9, %cst_8 {dimension_numbers = #tpu.dot_dimension_numbers<[1], [0], [0], [1], [0, 0, 1, 1], [], []>} : vector<128x128xbf16>, vector<128x256xbf16>, vector<128x256xf32> -> vector<128x256xf32>
    %c0_9 = arith.constant 0 : index
    %c0_10 = arith.constant 0 : index
    %11 = vector.load %arg5[%c0_9, %c0_10] : memref<1x256xf32, #tpu.memory_space<vmem>>, vector<1x256xf32>
    %12 = vector.broadcast %11 : vector<1x256xf32> to vector<128x256xf32>
    %13 = arith.addf %10, %12 : vector<128x256xf32>
    %cst_11 = arith.constant 0.000000e+00 : f32
    %14 = vector.broadcast %cst_11 : f32 to vector<128x256xf32>
    %15 = arith.maximumf %13, %14 : vector<128x256xf32>
    %16 = arith.truncf %15 : vector<128x256xf32> to vector<128x256xbf16>
    %c0_12 = arith.constant 0 : index
    %c0_13 = arith.constant 0 : index
    %17 = vector.load %arg6[%c0_12, %c0_13] : memref<256x128xbf16, #tpu.memory_space<vmem>>, vector<256x128xbf16>
    %cst_14 = arith.constant dense<0.000000e+00> : vector<128x128xf32>
    %18 = tpu.matmul %16, %17, %cst_14 {dimension_numbers = #tpu.dot_dimension_numbers<[1], [0], [0], [1], [0, 0, 1, 1], [], []>} : vector<128x256xbf16>, vector<256x128xbf16>, vector<128x128xf32> -> vector<128x128xf32>
    %c0_15 = arith.constant 0 : index
    %c0_16 = arith.constant 0 : index
    %19 = vector.load %arg7[%c0_15, %c0_16] : memref<1x128xf32, #tpu.memory_space<vmem>>, vector<1x128xf32>
    %20 = vector.broadcast %19 : vector<1x128xf32> to vector<128x128xf32>
    %21 = arith.addf %18, %20 : vector<128x128xf32>
    %cst_17 = arith.constant 0.000000e+00 : f32
    %22 = vector.broadcast %cst_17 : f32 to vector<128x128xf32>
    %23 = arith.maximumf %21, %22 : vector<128x128xf32>
    %24 = arith.truncf %23 : vector<128x128xf32> to vector<128x128xbf16>
    %c0_18 = arith.constant 0 : index
    %c0_19 = arith.constant 0 : index
    %25 = vector.load %arg8[%c0_18, %c0_19] : memref<128x128xbf16, #tpu.memory_space<vmem>>, vector<128x128xbf16>
    %cst_20 = arith.constant dense<0.000000e+00> : vector<128x128xf32>
    %26 = tpu.matmul %24, %25, %cst_20 {dimension_numbers = #tpu.dot_dimension_numbers<[1], [0], [0], [1], [0, 0, 1, 1], [], []>} : vector<128x128xbf16>, vector<128x128xbf16>, vector<128x128xf32> -> vector<128x128xf32>
    %c0_21 = arith.constant 0 : index
    %c0_22 = arith.constant 0 : index
    %27 = vector.load %arg9[%c0_21, %c0_22] : memref<1x128xf32, #tpu.memory_space<vmem>>, vector<1x128xf32>
    %28 = vector.broadcast %27 : vector<1x128xf32> to vector<128x128xf32>
    %29 = arith.addf %26, %28 : vector<128x128xf32>
    %c0_23 = arith.constant 0 : index
    %c0_24 = arith.constant 0 : index
    %30 = vector.load %arg10[%c0_23, %c0_24] : memref<128x128xf32, #tpu.memory_space<vmem>>, vector<128x128xf32>
    tpu.vector_store %arg10[%c0_23, %c0_24], %29 {strides = array<i32>} : memref<128x128xf32, #tpu.memory_space<vmem>>, vector<128x128xf32>,
    return
  }
  func.func @transform_0(%arg0: i32) -> (i32, i32) {
    %c0_i32 = arith.constant 0 : i32
    %c0_i32_0 = arith.constant 0 : i32
    return %arg0, %c0_i32 : i32, i32
  }
  func.func @transform_1(%arg0: i32) -> (i32, i32) {
    %c0_i32 = arith.constant 0 : i32
    %c0_i32_0 = arith.constant 0 : i32
    %c0_i32_1 = arith.constant 0 : i32
    return %c0_i32, %c0_i32_0 : i32, i32
  }
  func.func @transform_2(%arg0: i32) -> (i32, i32) {
    %c0_i32 = arith.constant 0 : i32
    %c0_i32_0 = arith.constant 0 : i32
    %c0_i32_1 = arith.constant 0 : i32
    return %c0_i32, %c0_i32_0 : i32, i32
  }
  func.func @transform_3(%arg0: i32) -> (i32, i32) {
    %c0_i32 = arith.constant 0 : i32
    %c0_i32_0 = arith.constant 0 : i32
    %c0_i32_1 = arith.constant 0 : i32
    return %c0_i32, %c0_i32_0 : i32, i32
  }
  func.func @transform_4(%arg0: i32) -> (i32, i32) {
    %c0_i32 = arith.constant 0 : i32
    %c0_i32_0 = arith.constant 0 : i32
    %c0_i32_1 = arith.constant 0 : i32
    return %c0_i32, %c0_i32_0 : i32, i32
  }
  func.func @transform_5(%arg0: i32) -> (i32, i32) {
    %c0_i32 = arith.constant 0 : i32
    %c0_i32_0 = arith.constant 0 : i32
    %c0_i32_1 = arith.constant 0 : i32
    return %c0_i32, %c0_i32_0 : i32, i32
  }
  func.func @transform_6(%arg0: i32) -> (i32, i32) {
    %c0_i32 = arith.constant 0 : i32
    %c0_i32_0 = arith.constant 0 : i32
    %c0_i32_1 = arith.constant 0 : i32
    return %c0_i32, %c0_i32_0 : i32, i32
  }
  func.func @transform_7(%arg0: i32) -> (i32, i32) {
    %c0_i32 = arith.constant 0 : i32
    %c0_i32_0 = arith.constant 0 : i32
    %c0_i32_1 = arith.constant 0 : i32
    return %c0_i32, %c0_i32_0 : i32, i32
  }
  func.func @transform_8(%arg0: i32) -> (i32, i32) {
    %c0_i32 = arith.constant 0 : i32
    %c0_i32_0 = arith.constant 0 : i32
    %c0_i32_1 = arith.constant 0 : i32
    return %c0_i32, %c0_i32_0 : i32, i32
  }
  func.func @transform_9(%arg0: i32) -> (i32, i32) {
    %c0_i32 = arith.constant 0 : i32
    %c0_i32_0 = arith.constant 0 : i32
    return %arg0, %c0_i32 : i32, i32
  }
}

</mosaic_0001>

<llo_original>
// kernel: net_forward.1
$region0: #{net_forward.1}
  #allocation0 [shape = 'u32[]', space=smem, size = 0x4, offset = 0x4, fixed_abs, tag = 'smem constant byte address 0x4 - core index']
  #allocation1 [shape = 'u32[144,128]{1,0:T(1,128)}', space=vmem, size = 0x12000, scoped, tag = 'internal scratch']
  %s0 = inlined_call_operand.vmem [shape: bf16[128,128], index: 0, kind: input, shape index: {}]
  %s1 = inlined_call_operand.vmem [shape: bf16[128,128], index: 1, kind: input, shape index: {}]
  %s2 = inlined_call_operand.vmem [shape: f32[1,128], index: 2, kind: input, shape index: {}]
  %s3 = inlined_call_operand.vmem [shape: bf16[128,256], index: 3, kind: input, shape index: {}]
  %s4 = inlined_call_operand.vmem [shape: f32[1,256], index: 4, kind: input, shape index: {}]
  %s5 = inlined_call_operand.vmem [shape: bf16[256,128], index: 5, kind: input, shape index: {}]
  %s6 = inlined_call_operand.vmem [shape: f32[1,128], index: 6, kind: input, shape index: {}]
  %s7 = inlined_call_operand.vmem [shape: bf16[128,128], index: 7, kind: input, shape index: {}]
  %s8 = inlined_call_operand.vmem [shape: f32[1,128], index: 8, kind: input, shape index: {}]
  %s9 = inlined_call_operand.vmem [shape: f32[128,128], index: 9, kind: output, shape index: {}]
  %s10 = sld [smem:[#allocation0]]
  $region46: #{net_forward.1} parent=0
    _
  %s12 = ssub.s32 1, %s10
  %s13 = scalar_select 0, %s12, %s10
  // Predicated region
  $region2: #{net_forward.1} parent=0 // pred_check
    _
  $region3: #{net_forward.1} parent=0 // pred_check_branch
    %15 = sbr.rel (0) target = $region5
  $region4: #{net_forward.1} parent=0 // pred_region
    _
  $region5: #{net_forward.1} parent=0 // pred_fallthru
    _
  // Predicated region
  $region6: #{net_forward.1} parent=0 // pred_check
    _
  $region7: #{net_forward.1} parent=0 // pred_check_branch
    %17 = sbr.rel (0) target = $region9
  $region8: #{net_forward.1} parent=0 // pred_region
    _
  $region9: #{net_forward.1} parent=0 // pred_fallthru
    _
  // Predicated region
  $region10: #{net_forward.1} parent=0 // pred_check
    _
  $region11: #{net_forward.1} parent=0 // pred_check_branch
    %19 = sbr.rel (0) target = $region13
  $region12: #{net_forward.1} parent=0 // pred_region
    _
  $region13: #{net_forward.1} parent=0 // pred_fallthru
    _
  // Predicated region
  $region14: #{net_forward.1} parent=0 // pred_check
    _
  $region15: #{net_forward.1} parent=0 // pred_check_branch
    %21 = sbr.rel (0) target = $region17
  $region16: #{net_forward.1} parent=0 // pred_region
    _
  $region17: #{net_forward.1} parent=0 // pred_fallthru
    _
  // Predicated region
  $region18: #{net_forward.1} parent=0 // pred_check
    _
  $region19: #{net_forward.1} parent=0 // pred_check_branch
    %23 = sbr.rel (0) target = $region21
  $region20: #{net_forward.1} parent=0 // pred_region
    _
  $region21: #{net_forward.1} parent=0 // pred_fallthru
    _
  // Predicated region
  $region22: #{net_forward.1} parent=0 // pred_check
    _
  $region23: #{net_forward.1} parent=0 // pred_check_branch
    %25 = sbr.rel (0) target = $region25
  $region24: #{net_forward.1} parent=0 // pred_region
    _
  $region25: #{net_forward.1} parent=0 // pred_fallthru
    _
  // Predicated region
  $region26: #{net_forward.1} parent=0 // pred_check
    _
  $region27: #{net_forward.1} parent=0 // pred_check_branch
    %27 = sbr.rel (0) target = $region29
  $region28: #{net_forward.1} parent=0 // pred_region
    _
  $region29: #{net_forward.1} parent=0 // pred_fallthru
    _
  // Predicated region
  $region30: #{net_forward.1} parent=0 // pred_check
    _
  $region31: #{net_forward.1} parent=0 // pred_check_branch
    %29 = sbr.rel (0) target = $region33
  $region32: #{net_forward.1} parent=0 // pred_region
    _
  $region33: #{net_forward.1} parent=0 // pred_fallthru
    _
  // Predicated region
  $region34: #{net_forward.1} parent=0 // pred_check
    _
  $region35: #{net_forward.1} parent=0 // pred_check_branch
    %31 = sbr.rel (0) target = $region37
  $region36: #{net_forward.1} parent=0 // pred_region
    _
  $region37: #{net_forward.1} parent=0 // pred_fallthru
    _
  %v33 = vld [vmem:[%s0] sm:$0xf]
  %v34 = vld [vmem:[%s0 + $0x4] sm:$0xf]
  %v35 = vld [vmem:[%s0 + $0x8] sm:$0xf]
  %v36 = vld [vmem:[%s0 + $0xc] sm:$0xf]
  %v37 = vld [vmem:[%s0 + $0x10] sm:$0xf]
  %v38 = vld [vmem:[%s0 + $0x14] sm:$0xf]
  %v39 = vld [vmem:[%s0 + $0x18] sm:$0xf]
  %v40 = vld [vmem:[%s0 + $0x1c] sm:$0xf]
  %v41 = vld [vmem:[%s0 + $0x20] sm:$0xf]
  %v42 = vld [vmem:[%s0 + $0x24] sm:$0xf]
  %v43 = vld [vmem:[%s0 + $0x28] sm:$0xf]
  %v44 = vld [vmem:[%s0 + $0x2c] sm:$0xf]
  %v45 = vld [vmem:[%s0 + $0x30] sm:$0xf]
  %v46 = vld [vmem:[%s0 + $0x34] sm:$0xf]
  %v47 = vld [vmem:[%s0 + $0x38] sm:$0xf]
  %v48 = vld [vmem:[%s0 + $0x3c] sm:$0xf]
  %v49 = vld [vmem:[%s1] sm:$0xf]
  %v50 = vld [vmem:[%s1 + $0x4] sm:$0xf]
  %v51 = vld [vmem:[%s1 + $0x8] sm:$0xf]
  %v52 = vld [vmem:[%s1 + $0xc] sm:$0xf]
  %v53 = vld [vmem:[%s1 + $0x10] sm:$0xf]
  %v54 = vld [vmem:[%s1 + $0x14] sm:$0xf]
  %v55 = vld [vmem:[%s1 + $0x18] sm:$0xf]
  %v56 = vld [vmem:[%s1 + $0x1c] sm:$0xf]
  %v57 = vld [vmem:[%s1 + $0x20] sm:$0xf]
  %v58 = vld [vmem:[%s1 + $0x24] sm:$0xf]
  %v59 = vld [vmem:[%s1 + $0x28] sm:$0xf]
  %v60 = vld [vmem:[%s1 + $0x2c] sm:$0xf]
  %v61 = vld [vmem:[%s1 + $0x30] sm:$0xf]
  %v62 = vld [vmem:[%s1 + $0x34] sm:$0xf]
  %v63 = vld [vmem:[%s1 + $0x38] sm:$0xf]
  %v64 = vld [vmem:[%s1 + $0x3c] sm:$0xf]
  %v65 = vld [vmem:[%s2] sm:$0x1]
  %v67 = vlaneseq
  %v68 = vshrl.u32 %v67, 7
  %v69 = vsub.s32 0, %v68
  %v70 = vrot.slane %v65, %v69
  %v88 = vunpack.c.l.b16 %v33
  %v89 = vunpack.c.l.b16 %v34
  %v90 = vunpack.c.l.b16 %v35
  %v91 = vunpack.c.l.b16 %v36
  %v92 = vunpack.c.l.b16 %v37
  %v93 = vunpack.c.l.b16 %v38
  %v94 = vunpack.c.l.b16 %v39
  %v95 = vunpack.c.l.b16 %v40
  %v96 = vunpack.c.l.b16 %v41
  %v97 = vunpack.c.l.b16 %v42
  %v98 = vunpack.c.l.b16 %v43
  %v99 = vunpack.c.l.b16 %v44
  %v100 = vunpack.c.l.b16 %v45
  %v101 = vunpack.c.l.b16 %v46
  %v102 = vunpack.c.l.b16 %v47
  %v103 = vunpack.c.l.b16 %v48
  %v104 = vpack.c.b16 %v89, %v88
  %v105 = vpack.c.b16 %v91, %v90
  %v106 = vpack.c.b16 %v93, %v92
  %v107 = vpack.c.b16 %v95, %v94
  %v108 = vpack.c.b16 %v97, %v96
  %v109 = vpack.c.b16 %v99, %v98
  %v110 = vpack.c.b16 %v101, %v100
  %v111 = vpack.c.b16 %v103, %v102
  %v136 = vunpack.c.l.b16 %v49
  %v137 = vunpack.c.l.b16 %v50
  %v138 = vunpack.c.l.b16 %v51
  %v139 = vunpack.c.l.b16 %v52
  %v140 = vunpack.c.l.b16 %v53
  %v141 = vunpack.c.l.b16 %v54
  %v142 = vunpack.c.l.b16 %v55
  %v143 = vunpack.c.l.b16 %v56
  %v144 = vunpack.c.l.b16 %v57
  %v145 = vunpack.c.l.b16 %v58
  %v146 = vunpack.c.l.b16 %v59
  %v147 = vunpack.c.l.b16 %v60
  %v148 = vunpack.c.l.b16 %v61
  %v149 = vunpack.c.l.b16 %v62
  %v150 = vunpack.c.l.b16 %v63
  %v151 = vunpack.c.l.b16 %v64
  %v152 = vpack.c.b16 %v137, %v136
  %v153 = vpack.c.b16 %v139, %v138
  %v154 = vpack.c.b16 %v141, %v140
  %v155 = vpack.c.b16 %v143, %v142
  %v156 = vpack.c.b16 %v145, %v144
  %v157 = vpack.c.b16 %v147, %v146
  %v158 = vpack.c.b16 %v149, %v148
  %v159 = vpack.c.b16 %v151, %v150
  %168 = vmatprep.subr.bf16.mxu0 0
  %169 = vmatpush1.bf16.msra.mxu0 %v159
  %170 = vmatprep.subr.bf16.mxu0 0
  %171 = vmatpush1.bf16.msra.mxu0 %v158
  %172 = vmatprep.subr.bf16.mxu0 0
  %173 = vmatpush1.bf16.msra.mxu0 %v157
  %174 = vmatprep.subr.bf16.mxu0 0
  %175 = vmatpush1.bf16.msra.mxu0 %v156
  %176 = vmatprep.subr.bf16.mxu0 0
  %177 = vmatpush1.bf16.msra.mxu0 %v155
  %178 = vmatprep.subr.bf16.mxu0 0
  %179 = vmatpush1.bf16.msra.mxu0 %v154
  %180 = vmatprep.subr.bf16.mxu0 0
  %181 = vmatpush1.bf16.msra.mxu0 %v153
  %182 = vmatprep.subr.bf16.mxu0 0
  %183 = vmatpush1.bf16.msra.mxu0 %v152
  %184 = vmatprep.subr.bf16.mxu0 0
  %185 = vmatpush2.bf16.msra.mxu0 0
  %186 = vmatprep.subr.bf16.mxu0 0
  %187 = vmatpush2.bf16.msra.mxu0 0
  %188 = vmatprep.subr.bf16.mxu0 0
  %189 = vmatpush2.bf16.msra.mxu0 0
  %190 = vmatprep.subr.bf16.mxu0 0
  %191 = vmatpush2.bf16.msra.mxu0 0
  %192 = vmatprep.subr.bf16.mxu0 0
  %193 = vmatpush2.bf16.msra.mxu0 0
  %194 = vmatprep.subr.bf16.mxu0 0
  %195 = vmatpush2.bf16.msra.mxu0 0
  %196 = vmatprep.subr.bf16.mxu0 0
  %197 = vmatpush2.bf16.msra.mxu0 0
  %198 = vmatprep.subr.bf16.mxu0 0
  %199 = vmatpush2.bf16.msra.mxu0 0
  %200 = vmatprep.mubr.bf16.mxu0 0
  %201 = vmatmul.mubr.bf16.gmra.mxu0 %v104
  %v202 = vpop.f32.mrf.mxu0
  %v203 = vadd.f32 %v70, %v202
  %v204 = vpop.f32.mrf.mxu0
  %v205 = vpop.f32.mrf.mxu0
  %v206 = vadd.f32 %v70, %v205
  %v207 = vpop.f32.mrf.mxu0
  %208 = vmatprep.mubr.bf16.mxu0 0
  %209 = vmatmul.mubr.bf16.gmra.mxu0 %v105
  %v210 = vpop.f32.mrf.mxu0
  %v211 = vadd.f32 %v70, %v210
  %v212 = vpop.f32.mrf.mxu0
  %v213 = vpop.f32.mrf.mxu0
  %v214 = vadd.f32 %v70, %v213
  %v215 = vpop.f32.mrf.mxu0
  %216 = vmatprep.mubr.bf16.mxu0 0
  %217 = vmatmul.mubr.bf16.gmra.mxu0 %v106
  %v218 = vpop.f32.mrf.mxu0
  %v219 = vadd.f32 %v70, %v218
  %v220 = vpop.f32.mrf.mxu0
  %v221 = vpop.f32.mrf.mxu0
  %v222 = vadd.f32 %v70, %v221
  %v223 = vpop.f32.mrf.mxu0
  %224 = vmatprep.mubr.bf16.mxu0 0
  %225 = vmatmul.mubr.bf16.gmra.mxu0 %v107
  %v226 = vpop.f32.mrf.mxu0
  %v227 = vadd.f32 %v70, %v226
  %v228 = vpop.f32.mrf.mxu0
  %v229 = vpop.f32.mrf.mxu0
  %v230 = vadd.f32 %v70, %v229
  %v231 = vpop.f32.mrf.mxu0
  %232 = vmatprep.mubr.bf16.mxu0 0
  %233 = vmatmul.mubr.bf16.gmra.mxu0 %v108
  %v234 = vpop.f32.mrf.mxu0
  %v235 = vadd.f32 %v70, %v234
  %v236 = vpop.f32.mrf.mxu0
  %v237 = vpop.f32.mrf.mxu0
  %v238 = vadd.f32 %v70, %v237
  %v239 = vpop.f32.mrf.mxu0
  %240 = vmatprep.mubr.bf16.mxu0 0
  %241 = vmatmul.mubr.bf16.gmra.mxu0 %v109
  %v242 = vpop.f32.mrf.mxu0
  %v243 = vadd.f32 %v70, %v242
  %v244 = vpop.f32.mrf.mxu0
  %v245 = vpop.f32.mrf.mxu0
  %v246 = vadd.f32 %v70, %v245
  %v247 = vpop.f32.mrf.mxu0
  %248 = vmatprep.mubr.bf16.mxu0 0
  %249 = vmatmul.mubr.bf16.gmra.mxu0 %v110
  %v250 = vpop.f32.mrf.mxu0
  %v251 = vadd.f32 %v70, %v250
  %v252 = vpop.f32.mrf.mxu0
  %v253 = vpop.f32.mrf.mxu0
  %v254 = vadd.f32 %v70, %v253
  %v255 = vpop.f32.mrf.mxu0
  %256 = vmatprep.mubr.bf16.mxu0 0
  %257 = vmatmul.mubr.bf16.gmra.mxu0 %v111
  %v258 = vpop.f32.mrf.mxu0
  %v259 = vadd.f32 %v70, %v258
  %v260 = vpop.f32.mrf.mxu0
  %v261 = vpop.f32.mrf.mxu0
  %v262 = vadd.f32 %v70, %v261
  %v263 = vpop.f32.mrf.mxu0
  %264 = vdwg.mxu0
  %v265 = vmax.f32 %v203, 0.0
  %v266 = vmax.f32 %v206, 0.0
  %v267 = vmax.f32 %v211, 0.0
  %v268 = vmax.f32 %v214, 0.0
  %v269 = vmax.f32 %v219, 0.0
  %v270 = vmax.f32 %v222, 0.0
  %v271 = vmax.f32 %v227, 0.0
  %v272 = vmax.f32 %v230, 0.0
  %v273 = vmax.f32 %v235, 0.0
  %v274 = vmax.f32 %v238, 0.0
  %v275 = vmax.f32 %v243, 0.0
  %v276 = vmax.f32 %v246, 0.0
  %v277 = vmax.f32 %v251, 0.0
  %v278 = vmax.f32 %v254, 0.0
  %v279 = vmax.f32 %v259, 0.0
  %v280 = vmax.f32 %v262, 0.0
  %v281 = vpack.c.bf16 %v266, %v265
  %v282 = vpack.c.bf16 %v268, %v267
  %v283 = vpack.c.bf16 %v270, %v269
  %v284 = vpack.c.bf16 %v272, %v271
  %v285 = vpack.c.bf16 %v274, %v273
  %v286 = vpack.c.bf16 %v276, %v275
  %v287 = vpack.c.bf16 %v278, %v277
  %v288 = vpack.c.bf16 %v280, %v279
  %v289 = vld [vmem:[%s3] sm:$0xff]
  %v290 = vld [vmem:[%s3 + $0x8] sm:$0xff]
  %v291 = vld [vmem:[%s3 + $0x10] sm:$0xff]
  %v292 = vld [vmem:[%s3 + $0x18] sm:$0xff]
  %v293 = vld [vmem:[%s3 + $0x20] sm:$0xff]
  %v294 = vld [vmem:[%s3 + $0x28] sm:$0xff]
  %v295 = vld [vmem:[%s3 + $0x30] sm:$0xff]
  %v296 = vld [vmem:[%s3 + $0x38] sm:$0xff]
  %v297 = vld [vmem:[%s3 + $0x40] sm:$0xff]
  %v298 = vld [vmem:[%s3 + $0x48] sm:$0xff]
  %v299 = vld [vmem:[%s3 + $0x50] sm:$0xff]
  %v300 = vld [vmem:[%s3 + $0x58] sm:$0xff]
  %v301 = vld [vmem:[%s3 + $0x60] sm:$0xff]
  %v302 = vld [vmem:[%s3 + $0x68] sm:$0xff]
  %v303 = vld [vmem:[%s3 + $0x70] sm:$0xff]
  %v304 = vld [vmem:[%s3 + $0x78] sm:$0xff]
  %v305 = vld [vmem:[%s4] sm:$0x3]
  %v307 = vlaneseq
  %v308 = vshrl.u32 %v307, 7
  %v309 = vsub.s32 0, %v308
  %v310 = vrot.slane %v305, %v309
  %v311 = vlaneseq
  %v312 = vshrl.u32 %v311, 7
  %v313 = vsub.s32 1, %v312
  %v314 = vrot.slane %v305, %v313
  %v333 = vunpack.c.l.b16 %v289
  %v334 = vunpack.c.h.b16 %v289
  %v335 = vunpack.c.l.b16 %v290
  %v336 = vunpack.c.h.b16 %v290
  %v337 = vunpack.c.l.b16 %v291
  %v338 = vunpack.c.h.b16 %v291
  %v339 = vunpack.c.l.b16 %v292
  %v340 = vunpack.c.h.b16 %v292
  %v341 = vunpack.c.l.b16 %v293
  %v342 = vunpack.c.h.b16 %v293
  %v343 = vunpack.c.l.b16 %v294
  %v344 = vunpack.c.h.b16 %v294
  %v345 = vunpack.c.l.b16 %v295
  %v346 = vunpack.c.h.b16 %v295
  %v347 = vunpack.c.l.b16 %v296
  %v348 = vunpack.c.h.b16 %v296
  %v349 = vunpack.c.l.b16 %v297
  %v350 = vunpack.c.h.b16 %v297
  %v351 = vunpack.c.l.b16 %v298
  %v352 = vunpack.c.h.b16 %v298
  %v353 = vunpack.c.l.b16 %v299
  %v354 = vunpack.c.h.b16 %v299
  %v355 = vunpack.c.l.b16 %v300
  %v356 = vunpack.c.h.b16 %v300
  %v357 = vunpack.c.l.b16 %v301
  %v358 = vunpack.c.h.b16 %v301
  %v359 = vunpack.c.l.b16 %v302
  %v360 = vunpack.c.h.b16 %v302
  %v361 = vunpack.c.l.b16 %v303
  %v362 = vunpack.c.h.b16 %v303
  %v363 = vunpack.c.l.b16 %v304
  %v364 = vunpack.c.h.b16 %v304
  %v365 = vpack.c.b16 %v335, %v333
  %v366 = vpack.c.b16 %v336, %v334
  %v367 = vpack.c.b16 %v339, %v337
  %v368 = vpack.c.b16 %v340, %v338
  %v369 = vpack.c.b16 %v343, %v341
  %v370 = vpack.c.b16 %v344, %v342
  %v371 = vpack.c.b16 %v347, %v345
  %v372 = vpack.c.b16 %v348, %v346
  %v373 = vpack.c.b16 %v351, %v349
  %v374 = vpack.c.b16 %v352, %v350
  %v375 = vpack.c.b16 %v355, %v353
  %v376 = vpack.c.b16 %v356, %v354
  %v377 = vpack.c.b16 %v359, %v357
  %v378 = vpack.c.b16 %v360, %v358
  %v379 = vpack.c.b16 %v363, %v361
  %v380 = vpack.c.b16 %v364, %v362
  %397 = vmatprep.subr.bf16.mxu0 %v380
  %398 = vmatpush1.bf16.msra.mxu0 %v379
  %399 = vmatprep.subr.bf16.mxu0 %v378
  %400 = vmatpush1.bf16.msra.mxu0 %v377
  %401 = vmatprep.subr.bf16.mxu0 %v376
  %402 = vmatpush1.bf16.msra.mxu0 %v375
  %403 = vmatprep.subr.bf16.mxu0 %v374
  %404 = vmatpush1.bf16.msra.mxu0 %v373
  %405 = vmatprep.subr.bf16.mxu0 %v372
  %406 = vmatpush1.bf16.msra.mxu0 %v371
  %407 = vmatprep.subr.bf16.mxu0 %v370
  %408 = vmatpush1.bf16.msra.mxu0 %v369
  %409 = vmatprep.subr.bf16.mxu0 %v368
  %410 = vmatpush1.bf16.msra.mxu0 %v367
  %411 = vmatprep.subr.bf16.mxu0 %v366
  %412 = vmatpush1.bf16.msra.mxu0 %v365
  %413 = vmatprep.subr.bf16.mxu0 0
  %414 = vmatpush2.bf16.msra.mxu0 0
  %415 = vmatprep.subr.bf16.mxu0 0
  %416 = vmatpush2.bf16.msra.mxu0 0
  %417 = vmatprep.subr.bf16.mxu0 0
  %418 = vmatpush2.bf16.msra.mxu0 0
  %419 = vmatprep.subr.bf16.mxu0 0
  %420 = vmatpush2.bf16.msra.mxu0 0
  %421 = vmatprep.subr.bf16.mxu0 0
  %422 = vmatpush2.bf16.msra.mxu0 0
  %423 = vmatprep.subr.bf16.mxu0 0
  %424 = vmatpush2.bf16.msra.mxu0 0
  %425 = vmatprep.subr.bf16.mxu0 0
  %426 = vmatpush2.bf16.msra.mxu0 0
  %427 = vmatprep.subr.bf16.mxu0 0
  %428 = vmatpush2.bf16.msra.mxu0 0
  %429 = vmatprep.mubr.bf16.mxu0 0
  %430 = vmatmul.mubr.bf16.gmra.mxu0 %v281
  %v431 = vpop.f32.mrf.mxu0
  %v432 = vadd.f32 %v310, %v431
  %v433 = vpop.f32.mrf.mxu0
  %v434 = vadd.f32 %v314, %v433
  %v435 = vpop.f32.mrf.mxu0
  %v436 = vadd.f32 %v310, %v435
  %v437 = vpop.f32.mrf.mxu0
  %v438 = vadd.f32 %v314, %v437
  %439 = vmatprep.mubr.bf16.mxu0 0
  %440 = vmatmul.mubr.bf16.gmra.mxu0 %v282
  %v441 = vpop.f32.mrf.mxu0
  %v442 = vadd.f32 %v310, %v441
  %v443 = vpop.f32.mrf.mxu0
  %v444 = vadd.f32 %v314, %v443
  %v445 = vpop.f32.mrf.mxu0
  %v446 = vadd.f32 %v310, %v445
  %v447 = vpop.f32.mrf.mxu0
  %v448 = vadd.f32 %v314, %v447
  %449 = vmatprep.mubr.bf16.mxu0 0
  %450 = vmatmul.mubr.bf16.gmra.mxu0 %v283
  %v451 = vpop.f32.mrf.mxu0
  %v452 = vadd.f32 %v310, %v451
  %v453 = vpop.f32.mrf.mxu0
  %v454 = vadd.f32 %v314, %v453
  %v455 = vpop.f32.mrf.mxu0
  %v456 = vadd.f32 %v310, %v455
  %v457 = vpop.f32.mrf.mxu0
  %v458 = vadd.f32 %v314, %v457
  %459 = vmatprep.mubr.bf16.mxu0 0
  %460 = vmatmul.mubr.bf16.gmra.mxu0 %v284
  %v461 = vpop.f32.mrf.mxu0
  %v462 = vadd.f32 %v310, %v461
  %v463 = vpop.f32.mrf.mxu0
  %v464 = vadd.f32 %v314, %v463
  %v465 = vpop.f32.mrf.mxu0
  %v466 = vadd.f32 %v310, %v465
  %v467 = vpop.f32.mrf.mxu0
  %v468 = vadd.f32 %v314, %v467
  %469 = vmatprep.mubr.bf16.mxu0 0
  %470 = vmatmul.mubr.bf16.gmra.mxu0 %v285
  %v471 = vpop.f32.mrf.mxu0
  %v472 = vadd.f32 %v310, %v471
  %v473 = vpop.f32.mrf.mxu0
  %v474 = vadd.f32 %v314, %v473
  %v475 = vpop.f32.mrf.mxu0
  %v476 = vadd.f32 %v310, %v475
  %v477 = vpop.f32.mrf.mxu0
  %v478 = vadd.f32 %v314, %v477
  %479 = vmatprep.mubr.bf16.mxu0 0
  %480 = vmatmul.mubr.bf16.gmra.mxu0 %v286
  %v481 = vpop.f32.mrf.mxu0
  %v482 = vadd.f32 %v310, %v481
  %v483 = vpop.f32.mrf.mxu0
  %v484 = vadd.f32 %v314, %v483
  %v485 = vpop.f32.mrf.mxu0
  %v486 = vadd.f32 %v310, %v485
  %v487 = vpop.f32.mrf.mxu0
  %v488 = vadd.f32 %v314, %v487
  %489 = vmatprep.mubr.bf16.mxu0 0
  %490 = vmatmul.mubr.bf16.gmra.mxu0 %v287
  %v491 = vpop.f32.mrf.mxu0
  %v492 = vadd.f32 %v310, %v491
  %v493 = vpop.f32.mrf.mxu0
  %v494 = vadd.f32 %v314, %v493
  %v495 = vpop.f32.mrf.mxu0
  %v496 = vadd.f32 %v310, %v495
  %v497 = vpop.f32.mrf.mxu0
  %v498 = vadd.f32 %v314, %v497
  %499 = vmatprep.mubr.bf16.mxu0 0
  %500 = vmatmul.mubr.bf16.gmra.mxu0 %v288
  %v501 = vpop.f32.mrf.mxu0
  %v502 = vadd.f32 %v310, %v501
  %v503 = vpop.f32.mrf.mxu0
  %v504 = vadd.f32 %v314, %v503
  %v505 = vpop.f32.mrf.mxu0
  %v506 = vadd.f32 %v310, %v505
  %v507 = vpop.f32.mrf.mxu0
  %v508 = vadd.f32 %v314, %v507
  %509 = vdwg.mxu0
  %v510 = vmax.f32 %v432, 0.0
  %v511 = vmax.f32 %v434, 0.0
  %v512 = vmax.f32 %v436, 0.0
  %v513 = vmax.f32 %v438, 0.0
  %v514 = vmax.f32 %v442, 0.0
  %v515 = vmax.f32 %v444, 0.0
  %v516 = vmax.f32 %v446, 0.0
  %v517 = vmax.f32 %v448, 0.0
  %v518 = vmax.f32 %v452, 0.0
  %v519 = vmax.f32 %v454, 0.0
  %v520 = vmax.f32 %v456, 0.0
  %v521 = vmax.f32 %v458, 0.0
  %v522 = vmax.f32 %v462, 0.0
  %v523 = vmax.f32 %v464, 0.0
  %v524 = vmax.f32 %v466, 0.0
  %v525 = vmax.f32 %v468, 0.0
  %v526 = vmax.f32 %v472, 0.0
  %v527 = vmax.f32 %v474, 0.0
  %v528 = vmax.f32 %v476, 0.0
  %v529 = vmax.f32 %v478, 0.0
  %v530 = vmax.f32 %v482, 0.0
  %v531 = vmax.f32 %v484, 0.0
  %v532 = vmax.f32 %v486, 0.0
  %v533 = vmax.f32 %v488, 0.0
  %v534 = vmax.f32 %v492, 0.0
  %v535 = vmax.f32 %v494, 0.0
  %v536 = vmax.f32 %v496, 0.0
  %v537 = vmax.f32 %v498, 0.0
  %v538 = vmax.f32 %v502, 0.0
  %v539 = vmax.f32 %v504, 0.0
  %v540 = vmax.f32 %v506, 0.0
  %v541 = vmax.f32 %v508, 0.0
  %v542 = vpack.c.bf16 %v512, %v510
  %v543 = vpack.c.bf16 %v513, %v511
  %v544 = vpack.c.bf16 %v516, %v514
  %v545 = vpack.c.bf16 %v517, %v515
  %v546 = vpack.c.bf16 %v520, %v518
  %v547 = vpack.c.bf16 %v521, %v519
  %v548 = vpack.c.bf16 %v524, %v522
  %v549 = vpack.c.bf16 %v525, %v523
  %v550 = vpack.c.bf16 %v528, %v526
  %v551 = vpack.c.bf16 %v529, %v527
  %v552 = vpack.c.bf16 %v532, %v530
  %v553 = vpack.c.bf16 %v533, %v531
  %v554 = vpack.c.bf16 %v536, %v534
  %v555 = vpack.c.bf16 %v537, %v535
  %v556 = vpack.c.bf16 %v540, %v538
  %v557 = vpack.c.bf16 %v541, %v539
  %v558 = vld [vmem:[%s5] sm:$0xf]
  %v559 = vld [vmem:[%s5 + $0x4] sm:$0xf]
  %v560 = vld [vmem:[%s5 + $0x8] sm:$0xf]
  %v561 = vld [vmem:[%s5 + $0xc] sm:$0xf]
  %v562 = vld [vmem:[%s5 + $0x10] sm:$0xf]
  %v563 = vld [vmem:[%s5 + $0x14] sm:$0xf]
  %v564 = vld [vmem:[%s5 + $0x18] sm:$0xf]
  %v565 = vld [vmem:[%s5 + $0x1c] sm:$0xf]
  %v566 = vld [vmem:[%s5 + $0x20] sm:$0xf]
  %v567 = vld [vmem:[%s5 + $0x24] sm:$0xf]
  %v568 = vld [vmem:[%s5 + $0x28] sm:$0xf]
  %v569 = vld [vmem:[%s5 + $0x2c] sm:$0xf]
  %v570 = vld [vmem:[%s5 + $0x30] sm:$0xf]
  %v571 = vld [vmem:[%s5 + $0x34] sm:$0xf]
  %v572 = vld [vmem:[%s5 + $0x38] sm:$0xf]
  %v573 = vld [vmem:[%s5 + $0x3c] sm:$0xf]
  %v574 = vld [vmem:[%s5 + $0x40] sm:$0xf]
  %v575 = vld [vmem:[%s5 + $0x44] sm:$0xf]
  %v576 = vld [vmem:[%s5 + $0x48] sm:$0xf]
  %v577 = vld [vmem:[%s5 + $0x4c] sm:$0xf]
  %v578 = vld [vmem:[%s5 + $0x50] sm:$0xf]
  %v579 = vld [vmem:[%s5 + $0x54] sm:$0xf]
  %v580 = vld [vmem:[%s5 + $0x58] sm:$0xf]
  %v581 = vld [vmem:[%s5 + $0x5c] sm:$0xf]
  %v582 = vld [vmem:[%s5 + $0x60] sm:$0xf]
  %v583 = vld [vmem:[%s5 + $0x64] sm:$0xf]
  %v584 = vld [vmem:[%s5 + $0x68] sm:$0xf]
  %v585 = vld [vmem:[%s5 + $0x6c] sm:$0xf]
  %v586 = vld [vmem:[%s5 + $0x70] sm:$0xf]
  %v587 = vld [vmem:[%s5 + $0x74] sm:$0xf]
  %v588 = vld [vmem:[%s5 + $0x78] sm:$0xf]
  %v589 = vld [vmem:[%s5 + $0x7c] sm:$0xf]
  %v590 = vld [vmem:[%s6] sm:$0x1]
  %v592 = vlaneseq
  %v593 = vshrl.u32 %v592, 7
  %v594 = vsub.s32 0, %v593
  %v595 = vrot.slane %v590, %v594
  %v629 = vunpack.c.l.b16 %v558
  %v630 = vunpack.c.l.b16 %v559
  %v631 = vunpack.c.l.b16 %v560
  %v632 = vunpack.c.l.b16 %v561
  %v633 = vunpack.c.l.b16 %v562
  %v634 = vunpack.c.l.b16 %v563
  %v635 = vunpack.c.l.b16 %v564
  %v636 = vunpack.c.l.b16 %v565
  %v637 = vunpack.c.l.b16 %v566
  %v638 = vunpack.c.l.b16 %v567
  %v639 = vunpack.c.l.b16 %v568
  %v640 = vunpack.c.l.b16 %v569
  %v641 = vunpack.c.l.b16 %v570
  %v642 = vunpack.c.l.b16 %v571
  %v643 = vunpack.c.l.b16 %v572
  %v644 = vunpack.c.l.b16 %v573
  %v645 = vunpack.c.l.b16 %v574
  %v646 = vunpack.c.l.b16 %v575
  %v647 = vunpack.c.l.b16 %v576
  %v648 = vunpack.c.l.b16 %v577
  %v649 = vunpack.c.l.b16 %v578
  %v650 = vunpack.c.l.b16 %v579
  %v651 = vunpack.c.l.b16 %v580
  %v652 = vunpack.c.l.b16 %v581
  %v653 = vunpack.c.l.b16 %v582
  %v654 = vunpack.c.l.b16 %v583
  %v655 = vunpack.c.l.b16 %v584
  %v656 = vunpack.c.l.b16 %v585
  %v657 = vunpack.c.l.b16 %v586
  %v658 = vunpack.c.l.b16 %v587
  %v659 = vunpack.c.l.b16 %v588
  %v660 = vunpack.c.l.b16 %v589
  %v661 = vpack.c.b16 %v630, %v629
  %v662 = vpack.c.b16 %v632, %v631
  %v663 = vpack.c.b16 %v634, %v633
  %v664 = vpack.c.b16 %v636, %v635
  %v665 = vpack.c.b16 %v638, %v637
  %v666 = vpack.c.b16 %v640, %v639
  %v667 = vpack.c.b16 %v642, %v641
  %v668 = vpack.c.b16 %v644, %v643
  %v669 = vpack.c.b16 %v646, %v645
  %v670 = vpack.c.b16 %v648, %v647
  %v671 = vpack.c.b16 %v650, %v649
  %v672 = vpack.c.b16 %v652, %v651
  %v673 = vpack.c.b16 %v654, %v653
  %v674 = vpack.c.b16 %v656, %v655
  %v675 = vpack.c.b16 %v658, %v657
  %v676 = vpack.c.b16 %v660, %v659
  %693 = vmatprep.subr.bf16.mxu0 0
  %694 = vmatpush1.bf16.msra.mxu0 %v668
  %695 = vmatprep.subr.bf16.mxu0 0
  %696 = vmatpush1.bf16.msra.mxu0 %v667
  %697 = vmatprep.subr.bf16.mxu0 0
  %698 = vmatpush1.bf16.msra.mxu0 %v666
  %699 = vmatprep.subr.bf16.mxu0 0
  %700 = vmatpush1.bf16.msra.mxu0 %v665
  %701 = vmatprep.subr.bf16.mxu0 0
  %702 = vmatpush1.bf16.msra.mxu0 %v664
  %703 = vmatprep.subr.bf16.mxu0 0
  %704 = vmatpush1.bf16.msra.mxu0 %v663
  %705 = vmatprep.subr.bf16.mxu0 0
  %706 = vmatpush1.bf16.msra.mxu0 %v662
  %707 = vmatprep.subr.bf16.mxu0 0
  %708 = vmatpush1.bf16.msra.mxu0 %v661
  %709 = vmatprep.subr.bf16.mxu0 0
  %710 = vmatpush2.bf16.msra.mxu0 %v676
  %711 = vmatprep.subr.bf16.mxu0 0
  %712 = vmatpush2.bf16.msra.mxu0 %v675
  %713 = vmatprep.subr.bf16.mxu0 0
  %714 = vmatpush2.bf16.msra.mxu0 %v674
  %715 = vmatprep.subr.bf16.mxu0 0
  %716 = vmatpush2.bf16.msra.mxu0 %v673
  %717 = vmatprep.subr.bf16.mxu0 0
  %718 = vmatpush2.bf16.msra.mxu0 %v672
  %719 = vmatprep.subr.bf16.mxu0 0
  %720 = vmatpush2.bf16.msra.mxu0 %v671
  %721 = vmatprep.subr.bf16.mxu0 0
  %722 = vmatpush2.bf16.msra.mxu0 %v670
  %723 = vmatprep.subr.bf16.mxu0 0
  %724 = vmatpush2.bf16.msra.mxu0 %v669
  %725 = vmatprep.mubr.bf16.mxu0 %v543
  %726 = vmatmul.mubr.bf16.gmra.mxu0 %v542
  %v727 = vpop.f32.mrf.mxu0
  %v728 = vadd.f32 %v595, %v727
  %v729 = vpop.f32.mrf.mxu0
  %v730 = vpop.f32.mrf.mxu0
  %v731 = vadd.f32 %v595, %v730
  %v732 = vpop.f32.mrf.mxu0
  %733 = vmatprep.mubr.bf16.mxu0 %v545
  %734 = vmatmul.mubr.bf16.gmra.mxu0 %v544
  %v735 = vpop.f32.mrf.mxu0
  %v736 = vadd.f32 %v595, %v735
  %v737 = vpop.f32.mrf.mxu0
  %v738 = vpop.f32.mrf.mxu0
  %v739 = vadd.f32 %v595, %v738
  %v740 = vpop.f32.mrf.mxu0
  %741 = vmatprep.mubr.bf16.mxu0 %v547
  %742 = vmatmul.mubr.bf16.gmra.mxu0 %v546
  %v743 = vpop.f32.mrf.mxu0
  %v744 = vadd.f32 %v595, %v743
  %v745 = vpop.f32.mrf.mxu0
  %v746 = vpop.f32.mrf.mxu0
  %v747 = vadd.f32 %v595, %v746
  %v748 = vpop.f32.mrf.mxu0
  %749 = vmatprep.mubr.bf16.mxu0 %v549
  %750 = vmatmul.mubr.bf16.gmra.mxu0 %v548
  %v751 = vpop.f32.mrf.mxu0
  %v752 = vadd.f32 %v595, %v751
  %v753 = vpop.f32.mrf.mxu0
  %v754 = vpop.f32.mrf.mxu0
  %v755 = vadd.f32 %v595, %v754
  %v756 = vpop.f32.mrf.mxu0
  %757 = vmatprep.mubr.bf16.mxu0 %v551
  %758 = vmatmul.mubr.bf16.gmra.mxu0 %v550
  %v759 = vpop.f32.mrf.mxu0
  %v760 = vadd.f32 %v595, %v759
  %v761 = vpop.f32.mrf.mxu0
  %v762 = vpop.f32.mrf.mxu0
  %v763 = vadd.f32 %v595, %v762
  %v764 = vpop.f32.mrf.mxu0
  %765 = vmatprep.mubr.bf16.mxu0 %v553
  %766 = vmatmul.mubr.bf16.gmra.mxu0 %v552
  %v767 = vpop.f32.mrf.mxu0
  %v768 = vadd.f32 %v595, %v767
  %v769 = vpop.f32.mrf.mxu0
  %v770 = vpop.f32.mrf.mxu0
  %v771 = vadd.f32 %v595, %v770
  %v772 = vpop.f32.mrf.mxu0
  %773 = vmatprep.mubr.bf16.mxu0 %v555
  %774 = vmatmul.mubr.bf16.gmra.mxu0 %v554
  %v775 = vpop.f32.mrf.mxu0
  %v776 = vadd.f32 %v595, %v775
  %v777 = vpop.f32.mrf.mxu0
  %v778 = vpop.f32.mrf.mxu0
  %v779 = vadd.f32 %v595, %v778
  %v780 = vpop.f32.mrf.mxu0
  %781 = vmatprep.mubr.bf16.mxu0 %v557
  %782 = vmatmul.mubr.bf16.gmra.mxu0 %v556
  %v783 = vpop.f32.mrf.mxu0
  %v784 = vadd.f32 %v595, %v783
  %v785 = vpop.f32.mrf.mxu0
  %v786 = vpop.f32.mrf.mxu0
  %v787 = vadd.f32 %v595, %v786
  %v788 = vpop.f32.mrf.mxu0
  %789 = vdwg.mxu0
  %v790 = vmax.f32 %v728, 0.0
  %v791 = vmax.f32 %v731, 0.0
  %v792 = vmax.f32 %v736, 0.0
  %v793 = vmax.f32 %v739, 0.0
  %v794 = vmax.f32 %v744, 0.0
  %v795 = vmax.f32 %v747, 0.0
  %v796 = vmax.f32 %v752, 0.0
  %v797 = vmax.f32 %v755, 0.0
  %v798 = vmax.f32 %v760, 0.0
  %v799 = vmax.f32 %v763, 0.0
  %v800 = vmax.f32 %v768, 0.0
  %v801 = vmax.f32 %v771, 0.0
  %v802 = vmax.f32 %v776, 0.0
  %v803 = vmax.f32 %v779, 0.0
  %v804 = vmax.f32 %v784, 0.0
  %v805 = vmax.f32 %v787, 0.0
  %v806 = vpack.c.bf16 %v791, %v790
  %v807 = vpack.c.bf16 %v793, %v792
  %v808 = vpack.c.bf16 %v795, %v794
  %v809 = vpack.c.bf16 %v797, %v796
  %v810 = vpack.c.bf16 %v799, %v798
  %v811 = vpack.c.bf16 %v801, %v800
  %v812 = vpack.c.bf16 %v803, %v802
  %v813 = vpack.c.bf16 %v805, %v804
  %v814 = vld [vmem:[%s7] sm:$0xf]
  %v815 = vld [vmem:[%s7 + $0x4] sm:$0xf]
  %v816 = vld [vmem:[%s7 + $0x8] sm:$0xf]
  %v817 = vld [vmem:[%s7 + $0xc] sm:$0xf]
  %v818 = vld [vmem:[%s7 + $0x10] sm:$0xf]
  %v819 = vld [vmem:[%s7 + $0x14] sm:$0xf]
  %v820 = vld [vmem:[%s7 + $0x18] sm:$0xf]
  %v821 = vld [vmem:[%s7 + $0x1c] sm:$0xf]
  %v822 = vld [vmem:[%s7 + $0x20] sm:$0xf]
  %v823 = vld [vmem:[%s7 + $0x24] sm:$0xf]
  %v824 = vld [vmem:[%s7 + $0x28] sm:$0xf]
  %v825 = vld [vmem:[%s7 + $0x2c] sm:$0xf]
  %v826 = vld [vmem:[%s7 + $0x30] sm:$0xf]
  %v827 = vld [vmem:[%s7 + $0x34] sm:$0xf]
  %v828 = vld [vmem:[%s7 + $0x38] sm:$0xf]
  %v829 = vld [vmem:[%s7 + $0x3c] sm:$0xf]
  %v830 = vld [vmem:[%s8] sm:$0x1]
  %v832 = vlaneseq
  %v833 = vshrl.u32 %v832, 7
  %v834 = vsub.s32 0, %v833
  %v835 = vrot.slane %v830, %v834
  %v853 = vunpack.c.l.b16 %v814
  %v854 = vunpack.c.l.b16 %v815
  %v855 = vunpack.c.l.b16 %v816
  %v856 = vunpack.c.l.b16 %v817
  %v857 = vunpack.c.l.b16 %v818
  %v858 = vunpack.c.l.b16 %v819
  %v859 = vunpack.c.l.b16 %v820
  %v860 = vunpack.c.l.b16 %v821
  %v861 = vunpack.c.l.b16 %v822
  %v862 = vunpack.c.l.b16 %v823
  %v863 = vunpack.c.l.b16 %v824
  %v864 = vunpack.c.l.b16 %v825
  %v865 = vunpack.c.l.b16 %v826
  %v866 = vunpack.c.l.b16 %v827
  %v867 = vunpack.c.l.b16 %v828
  %v868 = vunpack.c.l.b16 %v829
  %v869 = vpack.c.b16 %v854, %v853
  %v870 = vpack.c.b16 %v856, %v855
  %v871 = vpack.c.b16 %v858, %v857
  %v872 = vpack.c.b16 %v860, %v859
  %v873 = vpack.c.b16 %v862, %v861
  %v874 = vpack.c.b16 %v864, %v863
  %v875 = vpack.c.b16 %v866, %v865
  %v876 = vpack.c.b16 %v868, %v867
  %885 = vmatprep.subr.bf16.mxu0 0
  %886 = vmatpush1.bf16.msra.mxu0 %v876
  %887 = vmatprep.subr.bf16.mxu0 0
  %888 = vmatpush1.bf16.msra.mxu0 %v875
  %889 = vmatprep.subr.bf16.mxu0 0
  %890 = vmatpush1.bf16.msra.mxu0 %v874
  %891 = vmatprep.subr.bf16.mxu0 0
  %892 = vmatpush1.bf16.msra.mxu0 %v873
  %893 = vmatprep.subr.bf16.mxu0 0
  %894 = vmatpush1.bf16.msra.mxu0 %v872
  %895 = vmatprep.subr.bf16.mxu0 0
  %896 = vmatpush1.bf16.msra.mxu0 %v871
  %897 = vmatprep.subr.bf16.mxu0 0
  %898 = vmatpush1.bf16.msra.mxu0 %v870
  %899 = vmatprep.subr.bf16.mxu0 0
  %900 = vmatpush1.bf16.msra.mxu0 %v869
  %901 = vmatprep.subr.bf16.mxu0 0
  %902 = vmatpush2.bf16.msra.mxu0 0
  %903 = vmatprep.subr.bf16.mxu0 0
  %904 = vmatpush2.bf16.msra.mxu0 0
  %905 = vmatprep.subr.bf16.mxu0 0
  %906 = vmatpush2.bf16.msra.mxu0 0
  %907 = vmatprep.subr.bf16.mxu0 0
  %908 = vmatpush2.bf16.msra.mxu0 0
  %909 = vmatprep.subr.bf16.mxu0 0
  %910 = vmatpush2.bf16.msra.mxu0 0
  %911 = vmatprep.subr.bf16.mxu0 0
  %912 = vmatpush2.bf16.msra.mxu0 0
  %913 = vmatprep.subr.bf16.mxu0 0
  %914 = vmatpush2.bf16.msra.mxu0 0
  %915 = vmatprep.subr.bf16.mxu0 0
  %916 = vmatpush2.bf16.msra.mxu0 0
  %917 = vmatprep.mubr.bf16.mxu0 0
  %918 = vmatmul.mubr.bf16.gmra.mxu0 %v806
  %v919 = vpop.f32.mrf.mxu0
  %v920 = vadd.f32 %v835, %v919
  %v921 = vpop.f32.mrf.mxu0
  %v922 = vpop.f32.mrf.mxu0
  %v923 = vadd.f32 %v835, %v922
  %v924 = vpop.f32.mrf.mxu0
  %925 = vmatprep.mubr.bf16.mxu0 0
  %926 = vmatmul.mubr.bf16.gmra.mxu0 %v807
  %v927 = vpop.f32.mrf.mxu0
  %v928 = vadd.f32 %v835, %v927
  %v929 = vpop.f32.mrf.mxu0
  %v930 = vpop.f32.mrf.mxu0
  %v931 = vadd.f32 %v835, %v930
  %v932 = vpop.f32.mrf.mxu0
  %933 = vmatprep.mubr.bf16.mxu0 0
  %934 = vmatmul.mubr.bf16.gmra.mxu0 %v808
  %v935 = vpop.f32.mrf.mxu0
  %v936 = vadd.f32 %v835, %v935
  %v937 = vpop.f32.mrf.mxu0
  %v938 = vpop.f32.mrf.mxu0
  %v939 = vadd.f32 %v835, %v938
  %v940 = vpop.f32.mrf.mxu0
  %941 = vmatprep.mubr.bf16.mxu0 0
  %942 = vmatmul.mubr.bf16.gmra.mxu0 %v809
  %v943 = vpop.f32.mrf.mxu0
  %v944 = vadd.f32 %v835, %v943
  %v945 = vpop.f32.mrf.mxu0
  %v946 = vpop.f32.mrf.mxu0
  %v947 = vadd.f32 %v835, %v946
  %v948 = vpop.f32.mrf.mxu0
  %949 = vmatprep.mubr.bf16.mxu0 0
  %950 = vmatmul.mubr.bf16.gmra.mxu0 %v810
  %v951 = vpop.f32.mrf.mxu0
  %v952 = vadd.f32 %v835, %v951
  %v953 = vpop.f32.mrf.mxu0
  %v954 = vpop.f32.mrf.mxu0
  %v955 = vadd.f32 %v835, %v954
  %v956 = vpop.f32.mrf.mxu0
  %957 = vmatprep.mubr.bf16.mxu0 0
  %958 = vmatmul.mubr.bf16.gmra.mxu0 %v811
  %v959 = vpop.f32.mrf.mxu0
  %v960 = vadd.f32 %v835, %v959
  %v961 = vpop.f32.mrf.mxu0
  %v962 = vpop.f32.mrf.mxu0
  %v963 = vadd.f32 %v835, %v962
  %v964 = vpop.f32.mrf.mxu0
  %965 = vmatprep.mubr.bf16.mxu0 0
  %966 = vmatmul.mubr.bf16.gmra.mxu0 %v812
  %v967 = vpop.f32.mrf.mxu0
  %v968 = vadd.f32 %v835, %v967
  %v969 = vpop.f32.mrf.mxu0
  %v970 = vpop.f32.mrf.mxu0
  %v971 = vadd.f32 %v835, %v970
  %v972 = vpop.f32.mrf.mxu0
  %973 = vmatprep.mubr.bf16.mxu0 0
  %974 = vmatmul.mubr.bf16.gmra.mxu0 %v813
  %v975 = vpop.f32.mrf.mxu0
  %v976 = vadd.f32 %v835, %v975
  %v977 = vpop.f32.mrf.mxu0
  %v978 = vpop.f32.mrf.mxu0
  %v979 = vadd.f32 %v835, %v978
  %v980 = vpop.f32.mrf.mxu0
  %981 = vdwg.mxu0
  %982 = vst [vmem:[%s9] sm:$0xff] %v920
  %983 = vst [vmem:[%s9 + $0x8] sm:$0xff] %v923
  %984 = vst [vmem:[%s9 + $0x10] sm:$0xff] %v928
  %985 = vst [vmem:[%s9 + $0x18] sm:$0xff] %v931
  %986 = vst [vmem:[%s9 + $0x20] sm:$0xff] %v936
  %987 = vst [vmem:[%s9 + $0x28] sm:$0xff] %v939
  %988 = vst [vmem:[%s9 + $0x30] sm:$0xff] %v944
  %989 = vst [vmem:[%s9 + $0x38] sm:$0xff] %v947
  %990 = vst [vmem:[%s9 + $0x40] sm:$0xff] %v952
  %991 = vst [vmem:[%s9 + $0x48] sm:$0xff] %v955
  %992 = vst [vmem:[%s9 + $0x50] sm:$0xff] %v960
  %993 = vst [vmem:[%s9 + $0x58] sm:$0xff] %v963
  %994 = vst [vmem:[%s9 + $0x60] sm:$0xff] %v968
  %995 = vst [vmem:[%s9 + $0x68] sm:$0xff] %v971
  %996 = vst [vmem:[%s9 + $0x70] sm:$0xff] %v976
  %997 = vst [vmem:[%s9 + $0x78] sm:$0xff] %v979
  // Predicated region
  $region38: #{net_forward.1} parent=0 // pred_check
    _
  $region39: #{net_forward.1} parent=0 // pred_check_branch
    %999 = sbr.rel (0) target = $region41
  $region40: #{net_forward.1} parent=0 // pred_region
    _
  $region41: #{net_forward.1} parent=0 // pred_fallthru
    _
  // Predicated region
  $region42: #{net_forward.1} parent=0 // pred_check
    _
  $region43: #{net_forward.1} parent=0 // pred_check_branch
    %1001 = sbr.rel (0) target = $region45
  $region44: #{net_forward.1} parent=0 // pred_region
    _
  $region45: #{net_forward.1} parent=0 // pred_fallthru
    _

</llo_original>
